<compile_context>
chip_gen: v7x
topology: tpu7x:2x2x1
jax: 0.10.0
libtpu: 0.0.40
codegen_flags: <defaults>
</compile_context>

<pallas_src>
import functools

import jax
import jax.numpy as jnp
from jax.experimental import pallas as pl
from jax.experimental.pallas import tpu as pltpu


def _round_up(n, m):
    return ((n + m - 1) // m) * m


def policy_kernel(x_ref, w1_ref, b1_ref, wh_ref, bh_ref,
                  probs_ref, value_ref, *, n_actions):
    x = x_ref[...]                                   # (bb, obs) f32
    obs = x.shape[1]

    # ---- affine1 + ReLU : K = obs is tiny, unroll as VPU FMAs (no MXU) ----
    acc = x[:, 0:1] * w1_ref[0:1, :]                 # (bb,1)*(1,128) -> (bb,128)
    for k in range(1, obs):                          # static unroll
        acc = acc + x[:, k:k + 1] * w1_ref[k:k + 1, :]
    h = jnp.maximum(acc + b1_ref[...], 0.0)          # (bb, 128) f32

    # ---- fused action+value head: one narrow bf16 MXU matmul, f32 accum ----
    logits = jnp.dot(h.astype(jnp.bfloat16), wh_ref[...],
                     preferred_element_type=jnp.float32)
    logits = logits + bh_ref[...]                    # (bb, head_pad) f32

    col = jax.lax.broadcasted_iota(jnp.int32, logits.shape, dimension=1)
    is_action = col < n_actions

    # numerically-stable softmax over the action lanes only
    masked = jnp.where(is_action, logits, jnp.float32(-jnp.inf))
    m = jnp.max(masked, axis=-1, keepdims=True)
    e = jnp.exp(masked - m)                          # exactly 0 outside actions
    denom = jnp.sum(e, axis=-1, keepdims=True)
    probs = e * pl.reciprocal(denom, approx=True)    # EUP vrcp: free bundle slot

    probs_ref[...] = probs[:, :n_actions]            # (bb, n_actions)
    value_ref[...] = logits[:, n_actions:n_actions + 1]   # (bb, 1)


def prepare_policy_params(w1, b1, wa, ba, wv, bv):
    """Precompute (once, with the parameters) the fused lane-padded head."""
    n_actions = wa.shape[1]
    head = n_actions + 1
    head_pad = _round_up(head, 8)
    w_head = jnp.pad(jnp.concatenate([wa, wv], axis=1),
                     ((0, 0), (0, head_pad - head))).astype(jnp.bfloat16)
    b_head = jnp.pad(jnp.concatenate([jnp.reshape(ba, (1, -1)),
                                      jnp.reshape(bv, (1, 1))], axis=1),
                     ((0, 0), (0, head_pad - head))).astype(jnp.float32)
    return dict(
        w1=w1.astype(jnp.float32),
        b1=jnp.reshape(b1, (1, -1)).astype(jnp.float32),
        w_head=w_head,
        b_head=b_head,
        n_actions=n_actions,
    )


def policy_forward(params, x, *, block_b=4096, xla_fallback_batch=0):
    """x: (B, obs). Returns (action_prob (B, n_actions), state_values (B, 1))."""
    B, obs = x.shape
    n_actions = params["n_actions"]
    hid = params["w1"].shape[1]
    head_pad = params["w_head"].shape[1]

    # Optional latency fast path for tiny RL step batches (skip kernel launch
    # overhead entirely and let XLA fuse the three tiny GEMMs).  Opt-in.
    if B <= xla_fallback_batch:
        h = jnp.maximum(x @ params["w1"] + params["b1"], 0.0)
        logits = jnp.dot(h.astype(jnp.bfloat16), params["w_head"],
                         preferred_element_type=jnp.float32) + params["b_head"]
        probs = jax.nn.softmax(logits[:, :n_actions], axis=-1)
        return probs, logits[:, n_actions:n_actions + 1]

    # Sublane-aligned batch tile.  Cap at ~ceil(B/2) so the parallel grid axis
    # always has >= 2 steps for large B (keeps both v7x TensorCores busy).
    bb = min(_round_up(block_b, 8), max(8, _round_up(pl.cdiv(B, 2), 8)))
    grid = (pl.cdiv(B, bb),)      # no jnp.pad: Pallas masks the ragged tail

    kernel = functools.partial(policy_kernel, n_actions=n_actions)
    probs, values = pl.pallas_call(
        kernel,
        out_shape=(jax.ShapeDtypeStruct((B, n_actions), jnp.float32),
                   jax.ShapeDtypeStruct((B, 1), jnp.float32)),
        grid=grid,
        in_specs=[
            pl.BlockSpec((bb, obs), lambda i: (i, 0)),          # x batch tile
            pl.BlockSpec((obs, hid), lambda i: (0, 0)),         # W1 (resident)
            pl.BlockSpec((1, hid), lambda i: (0, 0)),           # b1
            pl.BlockSpec((hid, head_pad), lambda i: (0, 0)),    # fused head W (bf16)
            pl.BlockSpec((1, head_pad), lambda i: (0, 0)),      # fused head b
        ],
        out_specs=(pl.BlockSpec((bb, n_actions), lambda i: (i, 0)),
                   pl.BlockSpec((bb, 1), lambda i: (i, 0))),
        compiler_params=pltpu.CompilerParams(
            dimension_semantics=("parallel",),
            vmem_limit_bytes=32 * 1024 * 1024),   # v5e default is only 16 MiB
    )(x, params["w1"], params["b1"], params["w_head"], params["b_head"])
    return probs, values


def _reference(x, w1, b1, wa, ba, wv, bv):
    hi = jax.lax.Precision.HIGHEST
    h = jnp.maximum(jnp.dot(x, w1, precision=hi) + b1, 0.0)
    ap = jax.nn.softmax(jnp.dot(h, wa, precision=hi) + ba, axis=-1)
    v = jnp.dot(h, wv, precision=hi) + bv
    return ap, v


if __name__ == "__main__":
    # Small synthetic problem consistent with the module (CartPole-like):
    #   observation_space.shape[0] = 4, hidden = 128, action_space.n = 2, batch = 2
    B, OBS, HID, ACT = 2, 4, 128, 2

    key = jax.random.PRNGKey(0)
    k = jax.random.split(key, 8)

    x = jax.random.normal(k[0], (B, OBS), dtype=jnp.float32)

    # PyTorch Linear stores (out, in); we keep the pre-transposed (in, out).
    w1 = jax.random.normal(k[1], (OBS, HID), dtype=jnp.float32) * 0.1
    b1 = jax.random.normal(k[2], (1, HID), dtype=jnp.float32) * 0.1
    wa = jax.random.normal(k[3], (HID, ACT), dtype=jnp.float32) * 0.1
    ba = jax.random.normal(k[4], (1, ACT), dtype=jnp.float32) * 0.1
    wv = jax.random.normal(k[5], (HID, 1), dtype=jnp.float32) * 0.1
    bv = jax.random.normal(k[6], (1, 1), dtype=jnp.float32) * 0.1

    params = prepare_policy_params(w1, b1, wa, ba, wv, bv)

    action_prob, state_values = policy_forward(params, x)
    jax.block_until_ready((action_prob, state_values))

    ap_ref, v_ref = _reference(x, w1, b1, wa, ba, wv, bv)
    assert action_prob.shape == (B, ACT) and state_values.shape == (B, 1)
    # Tolerances account for the bf16 MXU head matmul + approx reciprocal.
    assert jnp.allclose(action_prob, ap_ref, atol=1e-2), "action_prob mismatch"
    assert jnp.allclose(jnp.sum(action_prob, axis=-1), 1.0, atol=5e-3)
    assert jnp.allclose(state_values, v_ref, atol=2e-2, rtol=2e-2), "state_values mismatch"

    # Also exercise the multi-step grid + ragged final tile (no jnp.pad path).
    B2 = 37
    x2 = jax.random.normal(k[7], (B2, OBS), dtype=jnp.float32)
    ap2, v2 = policy_forward(params, x2, block_b=16)   # grid = 3, ragged tail of 5
    jax.block_until_ready((ap2, v2))
    ap2_ref, v2_ref = _reference(x2, w1, b1, wa, ba, wv, bv)
    assert ap2.shape == (B2, ACT) and v2.shape == (B2, 1)
    assert jnp.allclose(ap2, ap2_ref, atol=1e-2), "ragged-grid action_prob mismatch"
    assert jnp.allclose(v2, v2_ref, atol=2e-2, rtol=2e-2), "ragged-grid value mismatch"

    # TODO(synk): saved_actions / rewards bookkeeping and action sampling are
    # host-side Python state in the PyTorch module, not part of the forward pass.
    print("KERNEL_OK")
</pallas_src>

<mosaic_0001>
module attributes {stable_mosaic.version = 11 : i64} {
  func.func @policy_kernel(%arg0: i32, %arg1: memref<8x4xf32, #tpu.memory_space<vmem>>, %arg2: memref<4x128xf32, #tpu.memory_space<vmem>>, %arg3: memref<1x128xf32, #tpu.memory_space<vmem>>, %arg4: memref<128x8xbf16, #tpu.memory_space<vmem>>, %arg5: memref<1x8xf32, #tpu.memory_space<vmem>>, %arg6: memref<8x2xf32, #tpu.memory_space<vmem>>, %arg7: memref<8x1xf32, #tpu.memory_space<vmem>>) attributes {dimension_semantics = [#tpu.dimension_semantics<parallel>], iteration_bounds = array<i64: 1>, scalar_prefetch = 0 : i64, scratch_operands = 0 : i64, tpu.core_type = #tpu.core_type<tc>, window_params = [{transform_indices = @transform_0, window_bounds = array<i64: 8, 4>}, {pipeline_mode = #tpu.pipeline_mode<synchronous>, transform_indices = @transform_1, window_bounds = array<i64: 4, 128>}, {pipeline_mode = #tpu.pipeline_mode<synchronous>, transform_indices = @transform_2, window_bounds = array<i64: 1, 128>}, {pipeline_mode = #tpu.pipeline_mode<synchronous>, transform_indices = @transform_3, window_bounds = array<i64: 128, 8>}, {pipeline_mode = #tpu.pipeline_mode<synchronous>, transform_indices = @transform_4, window_bounds = array<i64: 1, 8>}, {transform_indices = @transform_5, window_bounds = array<i64: 8, 2>}, {transform_indices = @transform_6, window_bounds = array<i64: 8, 1>}]} {
    %c0 = arith.constant 0 : index
    %c0_0 = arith.constant 0 : index
    %0 = vector.load %arg1[%c0, %c0_0] : memref<8x4xf32, #tpu.memory_space<vmem>>, vector<8x4xf32>
    %1 = vector.extract_strided_slice %0 {offsets = [0, 0], sizes = [8, 1], strides = [1, 1]} : vector<8x4xf32> to vector<8x1xf32>
    %c0_1 = arith.constant 0 : index
    %c0_2 = arith.constant 0 : index
    %2 = vector.load %arg2[%c0_1, %c0_2] : memref<4x128xf32, #tpu.memory_space<vmem>>, vector<1x128xf32>
    %3 = vector.broadcast %1 : vector<8x1xf32> to vector<8x128xf32>
    %4 = vector.broadcast %2 : vector<1x128xf32> to vector<8x128xf32>
    %5 = arith.mulf %3, %4 : vector<8x128xf32>
    %6 = vector.extract_strided_slice %0 {offsets = [0, 1], sizes = [8, 1], strides = [1, 1]} : vector<8x4xf32> to vector<8x1xf32>
    %c1 = arith.constant 1 : index
    %c0_3 = arith.constant 0 : index
    %7 = vector.load %arg2[%c1, %c0_3] : memref<4x128xf32, #tpu.memory_space<vmem>>, vector<1x128xf32>
    %8 = vector.broadcast %6 : vector<8x1xf32> to vector<8x128xf32>
    %9 = vector.broadcast %7 : vector<1x128xf32> to vector<8x128xf32>
    %10 = arith.mulf %8, %9 : vector<8x128xf32>
    %11 = arith.addf %5, %10 : vector<8x128xf32>
    %12 = vector.extract_strided_slice %0 {offsets = [0, 2], sizes = [8, 1], strides = [1, 1]} : vector<8x4xf32> to vector<8x1xf32>
    %c2 = arith.constant 2 : index
    %c0_4 = arith.constant 0 : index
    %13 = vector.load %arg2[%c2, %c0_4] : memref<4x128xf32, #tpu.memory_space<vmem>>, vector<1x128xf32>
    %14 = vector.broadcast %12 : vector<8x1xf32> to vector<8x128xf32>
    %15 = vector.broadcast %13 : vector<1x128xf32> to vector<8x128xf32>
    %16 = arith.mulf %14, %15 : vector<8x128xf32>
    %17 = arith.addf %11, %16 : vector<8x128xf32>
    %18 = vector.extract_strided_slice %0 {offsets = [0, 3], sizes = [8, 1], strides = [1, 1]} : vector<8x4xf32> to vector<8x1xf32>
    %c3 = arith.constant 3 : index
    %c0_5 = arith.constant 0 : index
    %19 = vector.load %arg2[%c3, %c0_5] : memref<4x128xf32, #tpu.memory_space<vmem>>, vector<1x128xf32>
    %20 = vector.broadcast %18 : vector<8x1xf32> to vector<8x128xf32>
    %21 = vector.broadcast %19 : vector<1x128xf32> to vector<8x128xf32>
    %22 = arith.mulf %20, %21 : vector<8x128xf32>
    %23 = arith.addf %17, %22 : vector<8x128xf32>
    %c0_6 = arith.constant 0 : index
    %c0_7 = arith.constant 0 : index
    %24 = vector.load %arg3[%c0_6, %c0_7] : memref<1x128xf32, #tpu.memory_space<vmem>>, vector<1x128xf32>
    %25 = vector.broadcast %24 : vector<1x128xf32> to vector<8x128xf32>
    %26 = arith.addf %23, %25 : vector<8x128xf32>
    %cst = arith.constant 0.000000e+00 : f32
    %27 = vector.broadcast %cst : f32 to vector<8x128xf32>
    %28 = arith.maximumf %26, %27 : vector<8x128xf32>
    %29 = arith.truncf %28 : vector<8x128xf32> to vector<8x128xbf16>
    %c0_8 = arith.constant 0 : index
    %c0_9 = arith.constant 0 : index
    %30 = vector.load %arg4[%c0_8, %c0_9] : memref<128x8xbf16, #tpu.memory_space<vmem>>, vector<128x8xbf16>
    %cst_10 = arith.constant dense<0.000000e+00> : vector<8x8xf32>
    %31 = tpu.matmul %29, %30, %cst_10 {dimension_numbers = #tpu.dot_dimension_numbers<[1], [0], [0], [1], [0, 0, 1, 1], [], []>} : vector<8x128xbf16>, vector<128x8xbf16>, vector<8x8xf32> -> vector<8x8xf32>
    %c0_11 = arith.constant 0 : index
    %c0_12 = arith.constant 0 : index
    %32 = vector.load %arg5[%c0_11, %c0_12] : memref<1x8xf32, #tpu.memory_space<vmem>>, vector<1x8xf32>
    %33 = vector.broadcast %32 : vector<1x8xf32> to vector<8x8xf32>
    %34 = arith.addf %31, %33 : vector<8x8xf32>
    %35 = tpu.iota {dimensions = array<i32: 1>} : vector<8x8xi32>
    %c2_i32 = arith.constant 2 : i32
    %36 = vector.broadcast %c2_i32 : i32 to vector<8x8xi32>
    %37 = arith.cmpi slt, %35, %36 : vector<8x8xi32>
    %cst_13 = arith.constant 0xFF800000 : f32
    %38 = vector.broadcast %cst_13 : f32 to vector<8x8xf32>
    %39 = arith.select %37, %34, %38 : vector<8x8xi1>, vector<8x8xf32>
    %cst_14 = arith.constant dense<0xFF800000> : vector<8xf32>
    %40 = vector.multi_reduction <maximumf>, %39, %cst_14 [1] : vector<8x8xf32> to vector<8xf32>
    %41 = vector.shape_cast %40 : vector<8xf32> to vector<8x1xf32>
    %42 = vector.broadcast %41 : vector<8x1xf32> to vector<8x8xf32>
    %43 = arith.subf %39, %42 : vector<8x8xf32>
    %44 = math.exp %43 : vector<8x8xf32>
    %cst_15 = arith.constant dense<0.000000e+00> : vector<8xf32>
    %45 = vector.multi_reduction <add>, %44, %cst_15 [1] : vector<8x8xf32> to vector<8xf32>
    %46 = vector.shape_cast %45 : vector<8xf32> to vector<8x1xf32>
    %47 = tpu.reciprocal %46 {approx = true} : vector<8x1xf32> -> vector<8x1xf32>
    %48 = vector.broadcast %47 : vector<8x1xf32> to vector<8x8xf32>
    %49 = arith.mulf %44, %48 : vector<8x8xf32>
    %50 = vector.extract_strided_slice %49 {offsets = [0, 0], sizes = [8, 2], strides = [1, 1]} : vector<8x8xf32> to vector<8x2xf32>
    %c0_16 = arith.constant 0 : index
    %c0_17 = arith.constant 0 : index
    %51 = vector.load %arg6[%c0_16, %c0_17] : memref<8x2xf32, #tpu.memory_space<vmem>>, vector<8x2xf32>
    tpu.vector_store %arg6[%c0_16, %c0_17], %50 {strides = array<i32>} : memref<8x2xf32, #tpu.memory_space<vmem>>, vector<8x2xf32>,
    %52 = vector.extract_strided_slice %34 {offsets = [0, 2], sizes = [8, 1], strides = [1, 1]} : vector<8x8xf32> to vector<8x1xf32>
    %c0_18 = arith.constant 0 : index
    %c0_19 = arith.constant 0 : index
    %53 = vector.load %arg7[%c0_18, %c0_19] : memref<8x1xf32, #tpu.memory_space<vmem>>, vector<8x1xf32>
    tpu.vector_store %arg7[%c0_18, %c0_19], %52 {strides = array<i32>} : memref<8x1xf32, #tpu.memory_space<vmem>>, vector<8x1xf32>,
    return
  }
  func.func @transform_0(%arg0: i32) -> (i32, i32) {
    %c0_i32 = arith.constant 0 : i32
    %c0_i32_0 = arith.constant 0 : i32
    return %arg0, %c0_i32 : i32, i32
  }
  func.func @transform_1(%arg0: i32) -> (i32, i32) {
    %c0_i32 = arith.constant 0 : i32
    %c0_i32_0 = arith.constant 0 : i32
    %c0_i32_1 = arith.constant 0 : i32
    return %c0_i32, %c0_i32_0 : i32, i32
  }
  func.func @transform_2(%arg0: i32) -> (i32, i32) {
    %c0_i32 = arith.constant 0 : i32
    %c0_i32_0 = arith.constant 0 : i32
    %c0_i32_1 = arith.constant 0 : i32
    return %c0_i32, %c0_i32_0 : i32, i32
  }
  func.func @transform_3(%arg0: i32) -> (i32, i32) {
    %c0_i32 = arith.constant 0 : i32
    %c0_i32_0 = arith.constant 0 : i32
    %c0_i32_1 = arith.constant 0 : i32
    return %c0_i32, %c0_i32_0 : i32, i32
  }
  func.func @transform_4(%arg0: i32) -> (i32, i32) {
    %c0_i32 = arith.constant 0 : i32
    %c0_i32_0 = arith.constant 0 : i32
    %c0_i32_1 = arith.constant 0 : i32
    return %c0_i32, %c0_i32_0 : i32, i32
  }
  func.func @transform_5(%arg0: i32) -> (i32, i32) {
    %c0_i32 = arith.constant 0 : i32
    %c0_i32_0 = arith.constant 0 : i32
    return %arg0, %c0_i32 : i32, i32
  }
  func.func @transform_6(%arg0: i32) -> (i32, i32) {
    %c0_i32 = arith.constant 0 : i32
    %c0_i32_0 = arith.constant 0 : i32
    return %arg0, %c0_i32 : i32, i32
  }
}

</mosaic_0001>

<llo_original>
// kernel: tpu_custom_call.1
$region0: #{tpu_custom_call.1}
  #allocation0 [shape = 'u32[]', space=smem, size = 0x4, offset = 0x4, fixed_abs, tag = 'smem constant byte address 0x4 - core index']
  #allocation1 [shape = 'u32[144,128]{1,0:T(1,128)}', space=vmem, size = 0x12000, scoped, tag = 'internal scratch']
  %s0 = inlined_call_operand.vmem [shape: f32[2,4], index: 0, kind: input, shape index: {}]
  %s1 = inlined_call_operand.vmem [shape: f32[4,128], index: 1, kind: input, shape index: {}]
  %s2 = inlined_call_operand.vmem [shape: f32[1,128], index: 2, kind: input, shape index: {}]
  %s3 = inlined_call_operand.vmem [shape: bf16[128,8], index: 3, kind: input, shape index: {}]
  %s4 = inlined_call_operand.vmem [shape: f32[1,8], index: 4, kind: input, shape index: {}]
  %s5 = inlined_call_operand.hbm [shape: f32[2,2], index: 5, kind: output, shape index: {0}]
  %s6 = inlined_call_operand.vmem [shape: f32[2,1], index: 6, kind: output, shape index: {1}]
  %7 = xla_tuple %s5, %s6
  %s8 = sld [smem:[#allocation0]]
  $region68: #{tpu_custom_call.1} parent=0
    _
  %s10 = ssub.s32 1, %s8
  %s11 = scalar_select 0, %s10, %s8
  $region1: #{tpu_custom_call.1} parent=0
    #allocation2 [shape = 'u8[4096]{0}', space=vmem, size = 0x1000, scoped, tag = 'output window, operand 0, single buffered']
    #allocation3 [shape = 's32[1]{0}', space=sflag, size = 0x4, scoped, tag = 'scoped memory for tpu_custom_call.1']
    #allocation4 [shape = 'u8[4096]{0}', space=vmem, size = 0x1000, scoped, tag = 'output window, operand 1, single buffered']
    %12 = vsyncpa [#allocation3], 0
    // Predicated region
    $region2: #{tpu_custom_call.1} parent=1 // pred_check
      _
    $region3: #{tpu_custom_call.1} parent=1 // pred_check_branch
      %14 = sbr.rel (0) target = $region5
    $region4: #{tpu_custom_call.1} parent=1 // pred_region
      _
    $region5: #{tpu_custom_call.1} parent=1 // pred_fallthru
      _
    // Predicated region
    $region6: #{tpu_custom_call.1} parent=1 // pred_check
      _
    $region7: #{tpu_custom_call.1} parent=1 // pred_check_branch
      %16 = sbr.rel (0) target = $region9
    $region8: #{tpu_custom_call.1} parent=1 // pred_region
      _
    $region9: #{tpu_custom_call.1} parent=1 // pred_fallthru
      _
    // Predicated region
    $region10: #{tpu_custom_call.1} parent=1 // pred_check
      _
    $region11: #{tpu_custom_call.1} parent=1 // pred_check_branch
      %18 = sbr.rel (0) target = $region13
    $region12: #{tpu_custom_call.1} parent=1 // pred_region
      _
    $region13: #{tpu_custom_call.1} parent=1 // pred_fallthru
      _
    // Predicated region
    $region14: #{tpu_custom_call.1} parent=1 // pred_check
      _
    $region15: #{tpu_custom_call.1} parent=1 // pred_check_branch
      %20 = sbr.rel (0) target = $region17
    $region16: #{tpu_custom_call.1} parent=1 // pred_region
      _
    $region17: #{tpu_custom_call.1} parent=1 // pred_fallthru
      _
    // Predicated region
    $region18: #{tpu_custom_call.1} parent=1 // pred_check
      _
    $region19: #{tpu_custom_call.1} parent=1 // pred_check_branch
      %22 = sbr.rel (0) target = $region21
    $region20: #{tpu_custom_call.1} parent=1 // pred_region
      _
    $region21: #{tpu_custom_call.1} parent=1 // pred_fallthru
      _
    %v24 = vld [vmem:[%s0] sm:$0xff]
    %v25 = vld [vmem:[%s1] sm:$0x1]
    %27 = vset.pattern.permute.xlu0 0
    %28 = vperm.xlu0 %27, %v24
    %v29 = vpop.permute.xlu0 %28
    %v31 = vlaneseq
    %v32 = vshrl.u32 %v31, 7
    %v33 = vsub.s32 0, %v32
    %v34 = vrot.slane %v25, %v33
    %v35 = vmul.f32 %v29, %v34
    %v36 = vld [vmem:[%s1 + $0x1] sm:$0x1]
    %37 = vset.pattern.permute.xlu0 1
    %38 = vperm.xlu0 %37, %v24
    %v39 = vpop.permute.xlu0 %38
    %v41 = vlaneseq
    %v42 = vshrl.u32 %v41, 7
    %v43 = vsub.s32 0, %v42
    %v44 = vrot.slane %v36, %v43
    %v45 = vmul.f32 %v39, %v44
    %v46 = vadd.f32 %v35, %v45
    %v47 = vld [vmem:[%s1 + $0x2] sm:$0x1]
    %48 = vset.pattern.permute.xlu0 2
    %49 = vperm.xlu0 %48, %v24
    %v50 = vpop.permute.xlu0 %49
    %v52 = vlaneseq
    %v53 = vshrl.u32 %v52, 7
    %v54 = vsub.s32 0, %v53
    %v55 = vrot.slane %v47, %v54
    %v56 = vmul.f32 %v50, %v55
    %v57 = vadd.f32 %v46, %v56
    %v58 = vld [vmem:[%s1 + $0x3] sm:$0x1]
    %59 = vset.pattern.permute.xlu0 3
    %60 = vperm.xlu0 %59, %v24
    %v61 = vpop.permute.xlu0 %60
    %v63 = vlaneseq
    %v64 = vshrl.u32 %v63, 7
    %v65 = vsub.s32 0, %v64
    %v66 = vrot.slane %v58, %v65
    %v67 = vmul.f32 %v61, %v66
    %v68 = vadd.f32 %v57, %v67
    %v69 = vld [vmem:[%s2] sm:$0x1]
    %v71 = vlaneseq
    %v72 = vshrl.u32 %v71, 7
    %v73 = vsub.s32 0, %v72
    %v74 = vrot.slane %v69, %v73
    %v76 = vadd.f32 %v68, %v74
    %v77 = vmax.f32 %v76, 0.0
    %v78 = vpack.c.bf16 %v77, %v77
    %v79 = vld [vmem:[%s3] sm:$0xf]
    %v80 = vld [vmem:[%s3 + $0x4] sm:$0xf]
    %v81 = vld [vmem:[%s3 + $0x8] sm:$0xf]
    %v82 = vld [vmem:[%s3 + $0xc] sm:$0xf]
    %v83 = vld [vmem:[%s3 + $0x10] sm:$0xf]
    %v84 = vld [vmem:[%s3 + $0x14] sm:$0xf]
    %v85 = vld [vmem:[%s3 + $0x18] sm:$0xf]
    %v86 = vld [vmem:[%s3 + $0x1c] sm:$0xf]
    %v87 = vld [vmem:[%s3 + $0x20] sm:$0xf]
    %v88 = vld [vmem:[%s3 + $0x24] sm:$0xf]
    %v89 = vld [vmem:[%s3 + $0x28] sm:$0xf]
    %v90 = vld [vmem:[%s3 + $0x2c] sm:$0xf]
    %v91 = vld [vmem:[%s3 + $0x30] sm:$0xf]
    %v92 = vld [vmem:[%s3 + $0x34] sm:$0xf]
    %v93 = vld [vmem:[%s3 + $0x38] sm:$0xf]
    %v94 = vld [vmem:[%s3 + $0x3c] sm:$0xf]
    %v95 = vld [vmem:[%s4] sm:$0x1]
    %v97 = vlaneseq
    %v98 = vshrl.u32 %v97, 7
    %v99 = vsub.s32 0, %v98
    %v100 = vrot.slane %v95, %v99
    %v118 = vunpack.c.l.b16 %v79
    %v119 = vunpack.c.l.b16 %v80
    %v120 = vunpack.c.l.b16 %v81
    %v121 = vunpack.c.l.b16 %v82
    %v122 = vunpack.c.l.b16 %v83
    %v123 = vunpack.c.l.b16 %v84
    %v124 = vunpack.c.l.b16 %v85
    %v125 = vunpack.c.l.b16 %v86
    %v126 = vunpack.c.l.b16 %v87
    %v127 = vunpack.c.l.b16 %v88
    %v128 = vunpack.c.l.b16 %v89
    %v129 = vunpack.c.l.b16 %v90
    %v130 = vunpack.c.l.b16 %v91
    %v131 = vunpack.c.l.b16 %v92
    %v132 = vunpack.c.l.b16 %v93
    %v133 = vunpack.c.l.b16 %v94
    %v134 = vpack.c.b16 %v119, %v118
    %v135 = vpack.c.b16 %v121, %v120
    %v136 = vpack.c.b16 %v123, %v122
    %v137 = vpack.c.b16 %v125, %v124
    %v138 = vpack.c.b16 %v127, %v126
    %v139 = vpack.c.b16 %v129, %v128
    %v140 = vpack.c.b16 %v131, %v130
    %v141 = vpack.c.b16 %v133, %v132
    %150 = vmatprep.subr.bf16.mxu0 0
    %151 = vmatpush1.bf16.msra.mxu0 %v134
    %152 = vmatprep.subr.bf16.mxu0 0
    %153 = vmatpush1.bf16.msra.mxu0 %v135
    %154 = vmatprep.subr.bf16.mxu0 0
    %155 = vmatpush1.bf16.msra.mxu0 %v136
    %156 = vmatprep.subr.bf16.mxu0 0
    %157 = vmatpush1.bf16.msra.mxu0 %v137
    %158 = vmatprep.subr.bf16.mxu0 0
    %159 = vmatpush1.bf16.msra.mxu0 %v138
    %160 = vmatprep.subr.bf16.mxu0 0
    %161 = vmatpush1.bf16.msra.mxu0 %v139
    %162 = vmatprep.subr.bf16.mxu0 0
    %163 = vmatpush1.bf16.msra.mxu0 %v140
    %164 = vmatprep.subr.bf16.mxu0 0
    %165 = vmatpush1.bf16.msra.mxu0 %v141
    %166 = vmatprep.subr.bf16.mxu0 0
    %167 = vmatpush1.bf16.msra.mxu0 0
    %168 = vmatprep.subr.bf16.mxu0 0
    %169 = vmatpush1.bf16.msra.mxu0 0
    %170 = vmatprep.subr.bf16.mxu0 0
    %171 = vmatpush1.bf16.msra.mxu0 0
    %172 = vmatprep.subr.bf16.mxu0 0
    %173 = vmatpush1.bf16.msra.mxu0 0
    %174 = vmatprep.subr.bf16.mxu0 0
    %175 = vmatpush1.bf16.msra.mxu0 0
    %176 = vmatprep.subr.bf16.mxu0 0
    %177 = vmatpush1.bf16.msra.mxu0 0
    %178 = vmatprep.subr.bf16.mxu0 0
    %179 = vmatpush1.bf16.msra.mxu0 0
    %180 = vmatprep.subr.bf16.mxu0 0
    %181 = vmatpush1.bf16.msra.mxu0 0
    %182 = vmatprep.mubr.bf16.mxu0 0
    %183 = vmatmul.mubr.bf16.gmra.mrb[0].mxu0 %v78
    %v184 = vpop.f32.mrb[0].mxu0
    %v185 = vadd.f32 %v100, %v184
    %v186 = vpop.f32.mrb[0].mxu0
    %v187 = vpop.f32.mrb[0].mxu0
    %v188 = vpop.f32.mrb[0].mxu0
    %189 = vdwg.mxu0
    %v190 = vlaneseq
    %v191 = vand.u32 %v190, 127
    %vm192 = vcmp.lt.s32.totalorder %v191, 2
    %v193 = vsel %vm192, %v185, -inf
    %vm194 = vcmask 64512
    %v195 = vsel %vm194, %v193, -inf
    %196 = vmax.xlane.f32.xlu0 %v195
    %v197 = vpop.xlane.xlu0 %196
    %v198 = vsub.f32 %v193, %v197
    %v199 = vmul.f32 %v198, 1.442695
    %v200 = vpow.pop %v199
    %v201 = vsel %vm194, %v200, 0.0
    %202 = vadd.xlane.f32.xlu0 %v201
    %v203 = vpop.xlane.xlu0 %202
    %v204 = vrcp.pop %v203
    %v205 = vmul.f32 %v200, %v204
    %vm206 = vcmask 15360
    %207 = vst.msk [vmem:[#allocation2] sm:$0xff] %vm206, %v205
    %209 = vrot.lane.b32.xlu0 %v185, 126
    %v210 = vpop.permute.xlu0 %209
    %vm212 = vcmask 7168
    %213 = vst.msk [vmem:[#allocation4] sm:$0xff] %vm212, %v210
    // Predicated region
    $region22: #{tpu_custom_call.1} parent=1 // pred_check
      _
    $region23: #{tpu_custom_call.1} parent=1 // pred_check_branch
      %215 = sbr.rel (0) target = $region25
    $region24: #{tpu_custom_call.1} parent=1 // pred_region
      %s217 = ssub.s32 128, 32
      %218 = vsyncadd [#allocation3], %s217
      %s219 = sshll.u32 [#allocation2], 4
      %s220 = int_to_ptr.vmem [resolvable:$true] %s219
      %225 = dma.vmem_to_hbm [thread:$0]  %s220, 32, %s5, [#allocation3], 32, 32, 2
    $region25: #{tpu_custom_call.1} parent=1 // pred_fallthru
      _
    // Predicated region
    $region26: #{tpu_custom_call.1} parent=1 // pred_check
      _
    $region27: #{tpu_custom_call.1} parent=1 // pred_check_branch
      %227 = sbr.rel (0) target = $region29
    $region28: #{tpu_custom_call.1} parent=1 // pred_region
      // Predicated region
      $region30: #{tpu_custom_call.1} parent=28 // pred_check
        _
      $region31: #{tpu_custom_call.1} parent=28 // pred_check_branch
        %229 = sbr.rel (0) target = $region33
      $region32: #{tpu_custom_call.1} parent=28 // pred_region
        // Predicated region
        $region34: #{tpu_custom_call.1} parent=32 // pred_check
          _
        $region35: #{tpu_custom_call.1} parent=32 // pred_check_branch
          %231 = sbr.rel target = $region37
        $region36: #{tpu_custom_call.1} parent=32 // pred_region
          // Predicated region
          $region49: #{tpu_custom_call.1} parent=36 // pred_check
            _
          $region50: #{tpu_custom_call.1} parent=36 // pred_check_branch
            %246 = sbr.rel (0) target = $region52
          $region51: #{tpu_custom_call.1} parent=36 // pred_region
            loop: start=0, step=1, limit=1
            $region53: #{tpu_custom_call.1} parent=51 // loop_pre_header
              _
            $region54: #{tpu_custom_call.1} parent=51 // loop_header
              %s249 = sphi 0, %s253
              %p250 = scmp.ge.s32.totalorder %s249, 1
              %s254 = sphi [#allocation4], [#allocation4]
              %s255 = sphi %s6, %s6
            $region55: #{tpu_custom_call.1} parent=51 // loop_header_branch
              %252 = sbr.rel (%p250) target = $region59
            $region56: #{tpu_custom_call.1} parent=51 // loop_body
              %v256 = vld [vmem:[%s254] sm:$0x3]
              %257 = vst [vmem:[%s255] sm:$0x3] %v256
            $region57: #{tpu_custom_call.1} parent=51 // loop_footer
              %s253 = sadd.s32 1, %s249
            $region58: #{tpu_custom_call.1} parent=51 // loop_footer_branch
              %248 = sbr.rel target = $region54
            $region59: #{tpu_custom_call.1} parent=51 // loop_exit
              _
          $region52: #{tpu_custom_call.1} parent=36 // pred_fallthru
            _
        $region37: #{tpu_custom_call.1} parent=32 // pred_fallthru
          _
        // Predicated region
        $region38: #{tpu_custom_call.1} parent=32 // pred_check
          _
        $region39: #{tpu_custom_call.1} parent=32 // pred_check_branch
          %233 = sbr.rel (0) target = $region41
        $region40: #{tpu_custom_call.1} parent=32 // pred_region
          loop: start=0, step=1, limit=1
          $region42: #{tpu_custom_call.1} parent=40 // loop_pre_header
            _
          $region43: #{tpu_custom_call.1} parent=40 // loop_header
            %s236 = sphi 0, %s240
            %p237 = scmp.ge.s32.totalorder %s236, 1
            %s241 = sphi [#allocation4], [#allocation4]
            %s242 = sphi %s6, %s6
          $region44: #{tpu_custom_call.1} parent=40 // loop_header_branch
            %239 = sbr.rel (%p237) target = $region48
          $region45: #{tpu_custom_call.1} parent=40 // loop_body
            %v243 = vld [vmem:[%s241] sm:$0x3]
            %244 = vst [vmem:[%s242] sm:$0x3] %v243
          $region46: #{tpu_custom_call.1} parent=40 // loop_footer
            %s240 = sadd.s32 1, %s236
          $region47: #{tpu_custom_call.1} parent=40 // loop_footer_branch
            %235 = sbr.rel target = $region43
          $region48: #{tpu_custom_call.1} parent=40 // loop_exit
            _
        $region41: #{tpu_custom_call.1} parent=32 // pred_fallthru
          _
      $region33: #{tpu_custom_call.1} parent=28 // pred_fallthru
        _
      %258 = vnop
    $region29: #{tpu_custom_call.1} parent=1 // pred_fallthru
      _
    // Predicated region
    $region60: #{tpu_custom_call.1} parent=1 // pred_check
      _
    $region61: #{tpu_custom_call.1} parent=1 // pred_check_branch
      %260 = sbr.rel (0) target = $region63
    $region62: #{tpu_custom_call.1} parent=1 // pred_region
      %261 = dma.done [#allocation3], 128
    $region63: #{tpu_custom_call.1} parent=1 // pred_fallthru
      _
    // Predicated region
    $region64: #{tpu_custom_call.1} parent=1 // pred_check
      _
    $region65: #{tpu_custom_call.1} parent=1 // pred_check_branch
      %263 = sbr.rel (0) target = $region67
    $region66: #{tpu_custom_call.1} parent=1 // pred_region
      _
    $region67: #{tpu_custom_call.1} parent=1 // pred_fallthru
      _
    %264 = vsyncpa [#allocation3], 1

</llo_original>
